<compile_context>
chip_gen: v6e
topology: v6e:2x2x1
jax: 0.10.0
libtpu: 0.0.40
codegen_flags: <defaults>
</compile_context>

<pallas_src>
import jax
import jax.numpy as jnp
from jax.experimental import pallas as pl
from jax.experimental.pallas import tpu as pltpu

LANE = 128   # lane padding for matmul output dims (lane-dense stores)
ROW = 16     # batch-tile row quantum (bf16 sublane packing)


def _round_up(x, m):
    return ((x + m - 1) // m) * m


def fop_kernel(x_ref,
               w1_ref, b1_ref,
               w2_ref, b2_ref,
               w3_ref, b3_ref,
               feats_ref, logits_ref):
    # Cast the f32 input tile to bf16 in-register (free VPU work, saves HBM traffic).
    x = x_ref[...].astype(jnp.bfloat16)

    # ---- fc1: Linear with BatchNorm folded in, then ReLU (Dropout = identity) ----
    h1 = jnp.dot(x, w1_ref[...], preferred_element_type=jnp.float32) + b1_ref[...]
    h1 = jnp.maximum(h1, 0.0)

    # ---- fc2: same structure ----
    h2 = jnp.dot(h1.astype(jnp.bfloat16), w2_ref[...],
                 preferred_element_type=jnp.float32) + b2_ref[...]
    h2 = jnp.maximum(h2, 0.0)

    # ---- F.normalize(x, p=2, dim=1, eps=1e-12); padded columns are exactly 0 ----
    sq = jnp.sum(h2 * h2, axis=-1, keepdims=True)
    f = h2 * jax.lax.rsqrt(jnp.maximum(sq, 1e-24))

    # ---- logits layer ----
    logits = jnp.dot(f.astype(jnp.bfloat16), w3_ref[...],
                     preferred_element_type=jnp.float32) + b3_ref[...]

    feats_ref[...] = f.astype(feats_ref.dtype)        # bf16 out (halved writes)
    logits_ref[...] = logits.astype(logits_ref.dtype)


def fop_forward(x, params, *, tile_target=None):
    """x: (B, feat_dim) float32.  params: folded/padded params from fold_params.
    Returns (feats (B, dim_embed) bf16, logits (B, n_class) bf16)."""
    B, F = x.shape
    w1, b1 = params["w1"], params["b1"]
    w2, b2 = params["w2"], params["b2"]
    w3, b3 = params["w3"], params["b3"]
    E_pad = w1.shape[1]
    C_pad = w3.shape[1]
    E, C = params["dim_embed"], params["n_class"]

    # ---- per-generation VMEM budget (64 MiB on v7x, 128 MiB on v5e/v6e) ----
    try:
        vmem_cap = int(pltpu.get_tpu_info().vmem_capacity_bytes)
    except Exception:
        vmem_cap = 64 << 20
    budget = int(0.85 * vmem_cap)          # leave headroom for compiler scratch/sems

    if tile_target is None:
        tile_target = 1024 if vmem_cap >= (96 << 20) else 512

    # ---- batch tiling: derive tile_b from B; >= 2 grid steps when B allows ----
    n_tiles = max(pl.cdiv(B, tile_target), 2 if B >= 2 * ROW else 1)
    tile_b = _round_up(pl.cdiv(B, n_tiles), ROW)

    def vmem_estimate(tb, weight_bufs=2):
        weights = weight_bufs * 2 * (w1.size + w2.size + w3.size)   # bf16 weights
        biases = weight_bufs * 4 * (b1.size + b2.size + b3.size)    # f32 biases
        x_tile = 2 * 4 * tb * F                                      # f32 in, dbl-buffered
        out_tile = 2 * 2 * tb * (E_pad + C_pad)                      # bf16 out, dbl-buffered
        interm = 4 * tb * (2 * E_pad + C_pad + 1)                    # f32 h1/h2/logits/rownorm
        return weights + biases + x_tile + out_tile + interm

    while tile_b > ROW and vmem_estimate(tile_b) > budget:
        tile_b = max(ROW, _round_up(tile_b // 2, ROW))
    n_tiles = pl.cdiv(B, tile_b)
    B_pad = n_tiles * tile_b

    # Pad batch rows only if needed; x stays f32 (no HBM bf16 copy).
    x_in = x if B_pad == B else jnp.zeros((B_pad, F), x.dtype).at[:B].set(x)

    vmem_bytes = min(max(vmem_estimate(tile_b) + (4 << 20), 16 << 20), budget)

    # Advisory cost estimate for XLA's scheduler around the custom call.
    flops = 2 * B_pad * (F * E_pad + E_pad * E_pad + E_pad * C_pad)
    bytes_accessed = (4 * B_pad * F
                      + 2 * (w1.size + w2.size + w3.size)
                      + 4 * (b1.size + b2.size + b3.size)
                      + 2 * B_pad * (E_pad + C_pad))
    cost = pl.CostEstimate(flops=flops, transcendentals=B_pad,
                           bytes_accessed=bytes_accessed)

    row_spec = lambda d: pl.BlockSpec((tile_b, d), lambda i: (i, 0))
    out_shape = (jax.ShapeDtypeStruct((B_pad, E_pad), jnp.bfloat16),
                 jax.ShapeDtypeStruct((B_pad, C_pad), jnp.bfloat16))

    def run(single_buffer_weights):
        if single_buffer_weights:
            # Constant index_map -> never re-fetched; one buffer is enough.
            res_spec = lambda a: pl.BlockSpec(a.shape, lambda i: (0, 0),
                                              pipeline_mode=pl.Buffered(1))
        else:
            res_spec = lambda a: pl.BlockSpec(a.shape, lambda i: (0, 0))
        in_specs = [row_spec(F),
                    res_spec(w1), res_spec(b1),
                    res_spec(w2), res_spec(b2),
                    res_spec(w3), res_spec(b3)]
        out_specs = [row_spec(E_pad), row_spec(C_pad)]
        return pl.pallas_call(
            fop_kernel,
            out_shape=out_shape,
            grid_spec=pltpu.PrefetchScalarGridSpec(
                num_scalar_prefetch=0,
                grid=(n_tiles,),
                in_specs=in_specs,
                out_specs=out_specs),
            compiler_params=pltpu.CompilerParams(
                dimension_semantics=("parallel",),
                vmem_limit_bytes=int(vmem_bytes)),
            cost_estimate=cost,
        )(x_in, w1, b1, w2, b2, w3, b3)

    try:
        feats, logits = run(True)
    except Exception:
        # pipeline_mode=pl.Buffered(1) unsupported on this jax build: fall back
        # to default double-buffered resident weights (correctness identical).
        feats, logits = run(False)

    return feats[:B, :E], logits[:B, :C]


def make_raw_params(key, feat_dim, dim_embed, n_class):
    """Deterministic PyTorch-style FOP parameters (f32, unfolded, unpadded)."""
    eps = 1e-5
    ks = jax.random.split(key, 14)

    def linear(kw, kb, f_in, f_out):
        # nn.Linear init range U(-1/sqrt(f_in), 1/sqrt(f_in)); stored as weight.T.
        lim = 1.0 / jnp.sqrt(jnp.float32(f_in))
        w = jax.random.uniform(kw, (f_in, f_out), jnp.float32, -lim, lim)
        b = jax.random.uniform(kb, (f_out,), jnp.float32, -lim, lim)
        return w, b

    def bn(kg, kb, km, kv, n):
        gamma = 1.0 + 0.1 * jax.random.normal(kg, (n,), jnp.float32)
        beta = 0.1 * jax.random.normal(kb, (n,), jnp.float32)
        mean = 0.1 * jax.random.normal(km, (n,), jnp.float32)
        var = jnp.abs(1.0 + 0.1 * jax.random.normal(kv, (n,), jnp.float32))
        return gamma, beta, mean, var

    w1, b1 = linear(ks[0], ks[1], feat_dim, dim_embed)
    g1, be1, m1, v1 = bn(ks[2], ks[3], ks[4], ks[5], dim_embed)
    w2, b2 = linear(ks[6], ks[7], dim_embed, dim_embed)
    g2, be2, m2, v2 = bn(ks[8], ks[9], ks[10], ks[11], dim_embed)
    w3, b3 = linear(ks[12], ks[13], dim_embed, n_class)

    return dict(w1=w1, b1=b1, g1=g1, be1=be1, m1=m1, v1=v1,
                w2=w2, b2=b2, g2=g2, be2=be2, m2=m2, v2=v2,
                w3=w3, b3=b3, eps=eps,
                feat_dim=feat_dim, dim_embed=dim_embed, n_class=n_class)


def fold_params(raw):
    """Fold eval-mode BatchNorm1d into the preceding Linear, zero-pad the
    matmul *output* dims to lane multiples (128), keep contraction dims
    unpadded, and cast weights to bf16 for the MXU."""
    eps = raw["eps"]
    F, E, C = raw["feat_dim"], raw["dim_embed"], raw["n_class"]
    E_pad = _round_up(E, LANE)
    C_pad = _round_up(C, LANE)

    def fold(w, b, gamma, beta, mean, var):
        scale = gamma / jnp.sqrt(var + eps)
        return w * scale[None, :], b * scale + (beta - mean * scale)

    w1, b1 = fold(raw["w1"], raw["b1"], raw["g1"], raw["be1"], raw["m1"], raw["v1"])
    w2, b2 = fold(raw["w2"], raw["b2"], raw["g2"], raw["be2"], raw["m2"], raw["v2"])
    w3, b3 = raw["w3"], raw["b3"]

    def pad_w(w, rows, cols):
        out = jnp.zeros((rows, cols), jnp.float32)
        return out.at[:w.shape[0], :w.shape[1]].set(w).astype(jnp.bfloat16)

    def pad_b(b, cols):
        out = jnp.zeros((1, cols), jnp.float32)
        return out.at[0, :b.shape[0]].set(b)

    return dict(
        w1=pad_w(w1, F, E_pad), b1=pad_b(b1, E_pad),       # contraction dim stays F
        w2=pad_w(w2, E_pad, E_pad), b2=pad_b(b2, E_pad),
        w3=pad_w(w3, E_pad, C_pad), b3=pad_b(b3, C_pad),
        dim_embed=E, n_class=C)


def fop_reference_exact(x, params):
    """Mirrors the kernel's numerics (bf16 operands, f32 accumulation, f32 out)."""
    w1 = params["w1"].astype(jnp.float32); b1 = params["b1"]
    w2 = params["w2"].astype(jnp.float32); b2 = params["b2"]
    w3 = params["w3"].astype(jnp.float32); b3 = params["b3"]
    xb = x.astype(jnp.bfloat16).astype(jnp.float32)
    h1 = jnp.maximum(xb @ w1 + b1, 0.0)
    h2 = jnp.maximum(h1.astype(jnp.bfloat16).astype(jnp.float32) @ w2 + b2, 0.0)
    f = h2 * jax.lax.rsqrt(jnp.maximum(jnp.sum(h2 * h2, -1, keepdims=True), 1e-24))
    logits = f.astype(jnp.bfloat16).astype(jnp.float32) @ w3 + b3
    E, C = params["dim_embed"], params["n_class"]
    return f[:, :E], logits[:, :C]


def fop_reference_f32(x, raw):
    """Unfolded f32 reference following the PyTorch module literally (eval mode)."""
    eps = raw["eps"]

    def block(h, w, b, gamma, beta, mean, var):
        h = h @ w + b
        h = (h - mean) / jnp.sqrt(var + eps) * gamma + beta
        return jnp.maximum(h, 0.0)                      # Dropout: identity in eval

    h1 = block(x, raw["w1"], raw["b1"], raw["g1"], raw["be1"], raw["m1"], raw["v1"])
    h2 = block(h1, raw["w2"], raw["b2"], raw["g2"], raw["be2"], raw["m2"], raw["v2"])
    n = jnp.maximum(jnp.linalg.norm(h2, axis=-1, keepdims=True), 1e-12)
    f = h2 / n
    return f, f @ raw["w3"] + raw["b3"]


if __name__ == "__main__":
    B, FEAT_DIM, DIM_EMBED, N_CLASS = 8, 64, 32, 16

    key = jax.random.PRNGKey(0)
    kx, kp = jax.random.split(key)
    x = jax.random.normal(kx, (B, FEAT_DIM), jnp.float32)

    raw = make_raw_params(kp, FEAT_DIM, DIM_EMBED, N_CLASS)
    params = fold_params(raw)

    feats, logits = fop_forward(x, params)
    jax.block_until_ready((feats, logits))

    assert feats.shape == (B, DIM_EMBED) and logits.shape == (B, N_CLASS)

    feats_f32 = feats.astype(jnp.float32)
    logits_f32 = logits.astype(jnp.float32)

    # Tight check: same bf16-folded weights / cast points as the kernel
    # (tolerance absorbs bf16 output rounding).
    ef, el = fop_reference_exact(x, params)
    assert jnp.allclose(feats_f32, ef, atol=1e-2, rtol=1e-2)
    assert jnp.allclose(logits_f32, el, atol=1e-2, rtol=1e-2)

    # Semantic check: literal Linear -> BatchNorm1d(eval) -> ReLU path in f32
    # (loose tolerance absorbs bf16 weight + output rounding).
    rf, rl = fop_reference_f32(x, raw)
    assert jnp.allclose(feats_f32, rf, atol=3e-2, rtol=3e-2)
    assert jnp.allclose(logits_f32, rl, atol=3e-2, rtol=3e-2)

    print("KERNEL_OK")
</pallas_src>

<mosaic_0001>
module attributes {stable_mosaic.version = 11 : i64} {
  func.func @fop_kernel(%arg0: i32, %arg1: memref<16x64xf32, #tpu.memory_space<vmem>>, %arg2: memref<64x128xbf16, #tpu.memory_space<vmem>>, %arg3: memref<1x128xf32, #tpu.memory_space<vmem>>, %arg4: memref<128x128xbf16, #tpu.memory_space<vmem>>, %arg5: memref<1x128xf32, #tpu.memory_space<vmem>>, %arg6: memref<128x128xbf16, #tpu.memory_space<vmem>>, %arg7: memref<1x128xf32, #tpu.memory_space<vmem>>, %arg8: memref<16x128xbf16, #tpu.memory_space<vmem>>, %arg9: memref<16x128xbf16, #tpu.memory_space<vmem>>) attributes {dimension_semantics = [#tpu.dimension_semantics<parallel>], iteration_bounds = array<i64: 1>, scalar_prefetch = 0 : i64, scratch_operands = 0 : i64, tpu.core_type = #tpu.core_type<tc>, window_params = [{transform_indices = @transform_0, window_bounds = array<i64: 16, 64>}, {pipeline_mode = #tpu.pipeline_mode<synchronous>, transform_indices = @transform_1, window_bounds = array<i64: 64, 128>}, {pipeline_mode = #tpu.pipeline_mode<synchronous>, transform_indices = @transform_2, window_bounds = array<i64: 1, 128>}, {pipeline_mode = #tpu.pipeline_mode<synchronous>, transform_indices = @transform_3, window_bounds = array<i64: 128, 128>}, {pipeline_mode = #tpu.pipeline_mode<synchronous>, transform_indices = @transform_4, window_bounds = array<i64: 1, 128>}, {pipeline_mode = #tpu.pipeline_mode<synchronous>, transform_indices = @transform_5, window_bounds = array<i64: 128, 128>}, {pipeline_mode = #tpu.pipeline_mode<synchronous>, transform_indices = @transform_6, window_bounds = array<i64: 1, 128>}, {transform_indices = @transform_7, window_bounds = array<i64: 16, 128>}, {transform_indices = @transform_8, window_bounds = array<i64: 16, 128>}]} {
    %c0 = arith.constant 0 : index
    %c0_0 = arith.constant 0 : index
    %0 = vector.load %arg1[%c0, %c0_0] : memref<16x64xf32, #tpu.memory_space<vmem>>, vector<16x64xf32>
    %1 = arith.truncf %0 : vector<16x64xf32> to vector<16x64xbf16>
    %c0_1 = arith.constant 0 : index
    %c0_2 = arith.constant 0 : index
    %2 = vector.load %arg2[%c0_1, %c0_2] : memref<64x128xbf16, #tpu.memory_space<vmem>>, vector<64x128xbf16>
    %cst = arith.constant dense<0.000000e+00> : vector<16x128xf32>
    %3 = tpu.matmul %1, %2, %cst {dimension_numbers = #tpu.dot_dimension_numbers<[1], [0], [0], [1], [0, 0, 1, 1], [], []>} : vector<16x64xbf16>, vector<64x128xbf16>, vector<16x128xf32> -> vector<16x128xf32>
    %c0_3 = arith.constant 0 : index
    %c0_4 = arith.constant 0 : index
    %4 = vector.load %arg3[%c0_3, %c0_4] : memref<1x128xf32, #tpu.memory_space<vmem>>, vector<1x128xf32>
    %5 = vector.broadcast %4 : vector<1x128xf32> to vector<16x128xf32>
    %6 = arith.addf %3, %5 : vector<16x128xf32>
    %cst_5 = arith.constant 0.000000e+00 : f32
    %7 = vector.broadcast %cst_5 : f32 to vector<16x128xf32>
    %8 = arith.maximumf %6, %7 : vector<16x128xf32>
    %9 = arith.truncf %8 : vector<16x128xf32> to vector<16x128xbf16>
    %c0_6 = arith.constant 0 : index
    %c0_7 = arith.constant 0 : index
    %10 = vector.load %arg4[%c0_6, %c0_7] : memref<128x128xbf16, #tpu.memory_space<vmem>>, vector<128x128xbf16>
    %cst_8 = arith.constant dense<0.000000e+00> : vector<16x128xf32>
    %11 = tpu.matmul %9, %10, %cst_8 {dimension_numbers = #tpu.dot_dimension_numbers<[1], [0], [0], [1], [0, 0, 1, 1], [], []>} : vector<16x128xbf16>, vector<128x128xbf16>, vector<16x128xf32> -> vector<16x128xf32>
    %c0_9 = arith.constant 0 : index
    %c0_10 = arith.constant 0 : index
    %12 = vector.load %arg5[%c0_9, %c0_10] : memref<1x128xf32, #tpu.memory_space<vmem>>, vector<1x128xf32>
    %13 = vector.broadcast %12 : vector<1x128xf32> to vector<16x128xf32>
    %14 = arith.addf %11, %13 : vector<16x128xf32>
    %cst_11 = arith.constant 0.000000e+00 : f32
    %15 = vector.broadcast %cst_11 : f32 to vector<16x128xf32>
    %16 = arith.maximumf %14, %15 : vector<16x128xf32>
    %17 = arith.mulf %16, %16 : vector<16x128xf32>
    %cst_12 = arith.constant dense<0.000000e+00> : vector<16xf32>
    %18 = vector.multi_reduction <add>, %17, %cst_12 [1] : vector<16x128xf32> to vector<16xf32>
    %19 = vector.shape_cast %18 : vector<16xf32> to vector<16x1xf32>
    %cst_13 = arith.constant 1.000000e-24 : f32
    %20 = vector.broadcast %cst_13 : f32 to vector<16x1xf32>
    %21 = arith.maximumf %19, %20 : vector<16x1xf32>
    %22 = math.rsqrt %21 : vector<16x1xf32>
    %23 = vector.broadcast %22 : vector<16x1xf32> to vector<16x128xf32>
    %24 = arith.mulf %16, %23 : vector<16x128xf32>
    %25 = arith.truncf %24 : vector<16x128xf32> to vector<16x128xbf16>
    %c0_14 = arith.constant 0 : index
    %c0_15 = arith.constant 0 : index
    %26 = vector.load %arg6[%c0_14, %c0_15] : memref<128x128xbf16, #tpu.memory_space<vmem>>, vector<128x128xbf16>
    %cst_16 = arith.constant dense<0.000000e+00> : vector<16x128xf32>
    %27 = tpu.matmul %25, %26, %cst_16 {dimension_numbers = #tpu.dot_dimension_numbers<[1], [0], [0], [1], [0, 0, 1, 1], [], []>} : vector<16x128xbf16>, vector<128x128xbf16>, vector<16x128xf32> -> vector<16x128xf32>
    %c0_17 = arith.constant 0 : index
    %c0_18 = arith.constant 0 : index
    %28 = vector.load %arg7[%c0_17, %c0_18] : memref<1x128xf32, #tpu.memory_space<vmem>>, vector<1x128xf32>
    %29 = vector.broadcast %28 : vector<1x128xf32> to vector<16x128xf32>
    %30 = arith.addf %27, %29 : vector<16x128xf32>
    %31 = arith.truncf %24 : vector<16x128xf32> to vector<16x128xbf16>
    %c0_19 = arith.constant 0 : index
    %c0_20 = arith.constant 0 : index
    %32 = vector.load %arg8[%c0_19, %c0_20] : memref<16x128xbf16, #tpu.memory_space<vmem>>, vector<16x128xbf16>
    tpu.vector_store %arg8[%c0_19, %c0_20], %31 {strides = array<i32>} : memref<16x128xbf16, #tpu.memory_space<vmem>>, vector<16x128xbf16>,
    %33 = arith.truncf %30 : vector<16x128xf32> to vector<16x128xbf16>
    %c0_21 = arith.constant 0 : index
    %c0_22 = arith.constant 0 : index
    %34 = vector.load %arg9[%c0_21, %c0_22] : memref<16x128xbf16, #tpu.memory_space<vmem>>, vector<16x128xbf16>
    tpu.vector_store %arg9[%c0_21, %c0_22], %33 {strides = array<i32>} : memref<16x128xbf16, #tpu.memory_space<vmem>>, vector<16x128xbf16>,
    return
  }
  func.func @transform_0(%arg0: i32) -> (i32, i32) {
    %c0_i32 = arith.constant 0 : i32
    %c0_i32_0 = arith.constant 0 : i32
    return %arg0, %c0_i32 : i32, i32
  }
  func.func @transform_1(%arg0: i32) -> (i32, i32) {
    %c0_i32 = arith.constant 0 : i32
    %c0_i32_0 = arith.constant 0 : i32
    %c0_i32_1 = arith.constant 0 : i32
    return %c0_i32, %c0_i32_0 : i32, i32
  }
  func.func @transform_2(%arg0: i32) -> (i32, i32) {
    %c0_i32 = arith.constant 0 : i32
    %c0_i32_0 = arith.constant 0 : i32
    %c0_i32_1 = arith.constant 0 : i32
    return %c0_i32, %c0_i32_0 : i32, i32
  }
  func.func @transform_3(%arg0: i32) -> (i32, i32) {
    %c0_i32 = arith.constant 0 : i32
    %c0_i32_0 = arith.constant 0 : i32
    %c0_i32_1 = arith.constant 0 : i32
    return %c0_i32, %c0_i32_0 : i32, i32
  }
  func.func @transform_4(%arg0: i32) -> (i32, i32) {
    %c0_i32 = arith.constant 0 : i32
    %c0_i32_0 = arith.constant 0 : i32
    %c0_i32_1 = arith.constant 0 : i32
    return %c0_i32, %c0_i32_0 : i32, i32
  }
  func.func @transform_5(%arg0: i32) -> (i32, i32) {
    %c0_i32 = arith.constant 0 : i32
    %c0_i32_0 = arith.constant 0 : i32
    %c0_i32_1 = arith.constant 0 : i32
    return %c0_i32, %c0_i32_0 : i32, i32
  }
  func.func @transform_6(%arg0: i32) -> (i32, i32) {
    %c0_i32 = arith.constant 0 : i32
    %c0_i32_0 = arith.constant 0 : i32
    %c0_i32_1 = arith.constant 0 : i32
    return %c0_i32, %c0_i32_0 : i32, i32
  }
  func.func @transform_7(%arg0: i32) -> (i32, i32) {
    %c0_i32 = arith.constant 0 : i32
    %c0_i32_0 = arith.constant 0 : i32
    return %arg0, %c0_i32 : i32, i32
  }
  func.func @transform_8(%arg0: i32) -> (i32, i32) {
    %c0_i32 = arith.constant 0 : i32
    %c0_i32_0 = arith.constant 0 : i32
    return %arg0, %c0_i32 : i32, i32
  }
}

module attributes {stable_mosaic.version = 11 : i64} {
  func.func @fop_kernel(%arg0: i32, %arg1: memref<16x64xf32, #tpu.memory_space<vmem>>, %arg2: memref<64x128xbf16, #tpu.memory_space<vmem>>, %arg3: memref<1x128xf32, #tpu.memory_space<vmem>>, %arg4: memref<128x128xbf16, #tpu.memory_space<vmem>>, %arg5: memref<1x128xf32, #tpu.memory_space<vmem>>, %arg6: memref<128x128xbf16, #tpu.memory_space<vmem>>, %arg7: memref<1x128xf32, #tpu.memory_space<vmem>>, %arg8: memref<16x128xbf16, #tpu.memory_space<vmem>>, %arg9: memref<16x128xbf16, #tpu.memory_space<vmem>>) attributes {dimension_semantics = [#tpu.dimension_semantics<parallel>], iteration_bounds = array<i64: 1>, scalar_prefetch = 0 : i64, scratch_operands = 0 : i64, tpu.core_type = #tpu.core_type<tc>, window_params = [{transform_indices = @transform_0, window_bounds = array<i64: 16, 64>}, {pipeline_mode = #tpu.pipeline_mode<synchronous>, transform_indices = @transform_1, window_bounds = array<i64: 64, 128>}, {pipeline_mode = #tpu.pipeline_mode<synchronous>, transform_indices = @transform_2, window_bounds = array<i64: 1, 128>}, {pipeline_mode = #tpu.pipeline_mode<synchronous>, transform_indices = @transform_3, window_bounds = array<i64: 128, 128>}, {pipeline_mode = #tpu.pipeline_mode<synchronous>, transform_indices = @transform_4, window_bounds = array<i64: 1, 128>}, {pipeline_mode = #tpu.pipeline_mode<synchronous>, transform_indices = @transform_5, window_bounds = array<i64: 128, 128>}, {pipeline_mode = #tpu.pipeline_mode<synchronous>, transform_indices = @transform_6, window_bounds = array<i64: 1, 128>}, {transform_indices = @transform_7, window_bounds = array<i64: 16, 128>}, {transform_indices = @transform_8, window_bounds = array<i64: 16, 128>}]} {
    %c0 = arith.constant 0 : index
    %c0_0 = arith.constant 0 : index
    %0 = vector.load %arg1[%c0, %c0_0] : memref<16x64xf32, #tpu.memory_space<vmem>>, vector<16x64xf32>
    %1 = arith.truncf %0 : vector<16x64xf32> to vector<16x64xbf16>
    %c0_1 = arith.constant 0 : index
    %c0_2 = arith.constant 0 : index
    %2 = vector.load %arg2[%c0_1, %c0_2] : memref<64x128xbf16, #tpu.memory_space<vmem>>, vector<64x128xbf16>
    %cst = arith.constant dense<0.000000e+00> : vector<16x128xf32>
    %3 = tpu.matmul %1, %2, %cst {dimension_numbers = #tpu.dot_dimension_numbers<[1], [0], [0], [1], [0, 0, 1, 1], [], []>} : vector<16x64xbf16>, vector<64x128xbf16>, vector<16x128xf32> -> vector<16x128xf32>
    %c0_3 = arith.constant 0 : index
    %c0_4 = arith.constant 0 : index
    %4 = vector.load %arg3[%c0_3, %c0_4] : memref<1x128xf32, #tpu.memory_space<vmem>>, vector<1x128xf32>
    %5 = vector.broadcast %4 : vector<1x128xf32> to vector<16x128xf32>
    %6 = arith.addf %3, %5 : vector<16x128xf32>
    %cst_5 = arith.constant 0.000000e+00 : f32
    %7 = vector.broadcast %cst_5 : f32 to vector<16x128xf32>
    %8 = arith.maximumf %6, %7 : vector<16x128xf32>
    %9 = arith.truncf %8 : vector<16x128xf32> to vector<16x128xbf16>
    %c0_6 = arith.constant 0 : index
    %c0_7 = arith.constant 0 : index
    %10 = vector.load %arg4[%c0_6, %c0_7] : memref<128x128xbf16, #tpu.memory_space<vmem>>, vector<128x128xbf16>
    %cst_8 = arith.constant dense<0.000000e+00> : vector<16x128xf32>
    %11 = tpu.matmul %9, %10, %cst_8 {dimension_numbers = #tpu.dot_dimension_numbers<[1], [0], [0], [1], [0, 0, 1, 1], [], []>} : vector<16x128xbf16>, vector<128x128xbf16>, vector<16x128xf32> -> vector<16x128xf32>
    %c0_9 = arith.constant 0 : index
    %c0_10 = arith.constant 0 : index
    %12 = vector.load %arg5[%c0_9, %c0_10] : memref<1x128xf32, #tpu.memory_space<vmem>>, vector<1x128xf32>
    %13 = vector.broadcast %12 : vector<1x128xf32> to vector<16x128xf32>
    %14 = arith.addf %11, %13 : vector<16x128xf32>
    %cst_11 = arith.constant 0.000000e+00 : f32
    %15 = vector.broadcast %cst_11 : f32 to vector<16x128xf32>
    %16 = arith.maximumf %14, %15 : vector<16x128xf32>
    %17 = arith.mulf %16, %16 : vector<16x128xf32>
    %cst_12 = arith.constant dense<0.000000e+00> : vector<16xf32>
    %18 = vector.multi_reduction <add>, %17, %cst_12 [1] : vector<16x128xf32> to vector<16xf32>
    %19 = vector.shape_cast %18 : vector<16xf32> to vector<16x1xf32>
    %cst_13 = arith.constant 1.000000e-24 : f32
    %20 = vector.broadcast %cst_13 : f32 to vector<16x1xf32>
    %21 = arith.maximumf %19, %20 : vector<16x1xf32>
    %22 = math.rsqrt %21 : vector<16x1xf32>
    %23 = vector.broadcast %22 : vector<16x1xf32> to vector<16x128xf32>
    %24 = arith.mulf %16, %23 : vector<16x128xf32>
    %25 = arith.truncf %24 : vector<16x128xf32> to vector<16x128xbf16>
    %c0_14 = arith.constant 0 : index
    %c0_15 = arith.constant 0 : index
    %26 = vector.load %arg6[%c0_14, %c0_15] : memref<128x128xbf16, #tpu.memory_space<vmem>>, vector<128x128xbf16>
    %cst_16 = arith.constant dense<0.000000e+00> : vector<16x128xf32>
    %27 = tpu.matmul %25, %26, %cst_16 {dimension_numbers = #tpu.dot_dimension_numbers<[1], [0], [0], [1], [0, 0, 1, 1], [], []>} : vector<16x128xbf16>, vector<128x128xbf16>, vector<16x128xf32> -> vector<16x128xf32>
    %c0_17 = arith.constant 0 : index
    %c0_18 = arith.constant 0 : index
    %28 = vector.load %arg7[%c0_17, %c0_18] : memref<1x128xf32, #tpu.memory_space<vmem>>, vector<1x128xf32>
    %29 = vector.broadcast %28 : vector<1x128xf32> to vector<16x128xf32>
    %30 = arith.addf %27, %29 : vector<16x128xf32>
    %31 = arith.truncf %24 : vector<16x128xf32> to vector<16x128xbf16>
    %c0_19 = arith.constant 0 : index
    %c0_20 = arith.constant 0 : index
    %32 = vector.load %arg8[%c0_19, %c0_20] : memref<16x128xbf16, #tpu.memory_space<vmem>>, vector<16x128xbf16>
    tpu.vector_store %arg8[%c0_19, %c0_20], %31 {strides = array<i32>} : memref<16x128xbf16, #tpu.memory_space<vmem>>, vector<16x128xbf16>,
    %33 = arith.truncf %30 : vector<16x128xf32> to vector<16x128xbf16>
    %c0_21 = arith.constant 0 : index
    %c0_22 = arith.constant 0 : index
    %34 = vector.load %arg9[%c0_21, %c0_22] : memref<16x128xbf16, #tpu.memory_space<vmem>>, vector<16x128xbf16>
    tpu.vector_store %arg9[%c0_21, %c0_22], %33 {strides = array<i32>} : memref<16x128xbf16, #tpu.memory_space<vmem>>, vector<16x128xbf16>,
    return
  }
  func.func @transform_0(%arg0: i32) -> (i32, i32) {
    %c0_i32 = arith.constant 0 : i32
    %c0_i32_0 = arith.constant 0 : i32
    return %arg0, %c0_i32 : i32, i32
  }
  func.func @transform_1(%arg0: i32) -> (i32, i32) {
    %c0_i32 = arith.constant 0 : i32
    %c0_i32_0 = arith.constant 0 : i32
    %c0_i32_1 = arith.constant 0 : i32
    return %c0_i32, %c0_i32_0 : i32, i32
  }
  func.func @transform_2(%arg0: i32) -> (i32, i32) {
    %c0_i32 = arith.constant 0 : i32
    %c0_i32_0 = arith.constant 0 : i32
    %c0_i32_1 = arith.constant 0 : i32
    return %c0_i32, %c0_i32_0 : i32, i32
  }
  func.func @transform_3(%arg0: i32) -> (i32, i32) {
    %c0_i32 = arith.constant 0 : i32
    %c0_i32_0 = arith.constant 0 : i32
    %c0_i32_1 = arith.constant 0 : i32
    return %c0_i32, %c0_i32_0 : i32, i32
  }
  func.func @transform_4(%arg0: i32) -> (i32, i32) {
    %c0_i32 = arith.constant 0 : i32
    %c0_i32_0 = arith.constant 0 : i32
    %c0_i32_1 = arith.constant 0 : i32
    return %c0_i32, %c0_i32_0 : i32, i32
  }
  func.func @transform_5(%arg0: i32) -> (i32, i32) {
    %c0_i32 = arith.constant 0 : i32
    %c0_i32_0 = arith.constant 0 : i32
    %c0_i32_1 = arith.constant 0 : i32
    return %c0_i32, %c0_i32_0 : i32, i32
  }
  func.func @transform_6(%arg0: i32) -> (i32, i32) {
    %c0_i32 = arith.constant 0 : i32
    %c0_i32_0 = arith.constant 0 : i32
    %c0_i32_1 = arith.constant 0 : i32
    return %c0_i32, %c0_i32_0 : i32, i32
  }
  func.func @transform_7(%arg0: i32) -> (i32, i32) {
    %c0_i32 = arith.constant 0 : i32
    %c0_i32_0 = arith.constant 0 : i32
    return %arg0, %c0_i32 : i32, i32
  }
  func.func @transform_8(%arg0: i32) -> (i32, i32) {
    %c0_i32 = arith.constant 0 : i32
    %c0_i32_0 = arith.constant 0 : i32
    return %arg0, %c0_i32 : i32, i32
  }
}

</mosaic_0001>

<llo_original>
// kernel: tpu_custom_call.1
$region0: #{tpu_custom_call.1}
  #allocation0 [shape = 'u32[]', space=smem, size = 0x4, offset = 0x4, fixed_abs, tag = 'smem constant byte address 0x4 - core index']
  #allocation1 [shape = 'u32[144,128]{1,0:T(1,128)}', space=vmem, size = 0x12000, scoped, tag = 'internal scratch']
  %s0 = inlined_call_operand.hbm [shape: f32[16,64], index: 0, kind: input, shape index: {}]
  %s1 = inlined_call_operand.hbm [shape: bf16[64,128], index: 1, kind: input, shape index: {}]
  %s2 = inlined_call_operand.vmem [shape: f32[1,128], index: 2, kind: input, shape index: {}]
  %s3 = inlined_call_operand.hbm [shape: bf16[128,128], index: 3, kind: input, shape index: {}]
  %s4 = inlined_call_operand.vmem [shape: f32[1,128], index: 4, kind: input, shape index: {}]
  %s5 = inlined_call_operand.hbm [shape: bf16[128,128], index: 5, kind: input, shape index: {}]
  %s6 = inlined_call_operand.vmem [shape: f32[1,128], index: 6, kind: input, shape index: {}]
  %s7 = inlined_call_operand.hbm [shape: bf16[16,128], index: 7, kind: output, shape index: {0}]
  %s8 = inlined_call_operand.hbm [shape: bf16[16,128], index: 8, kind: output, shape index: {1}]
  %9 = xla_tuple %s7, %s8
  %s10 = sld [smem:[#allocation0]]
  $region62: #{tpu_custom_call.1} parent=0
    _
  %s12 = ssub.s32 1, %s10
  %s13 = scalar_select 0, %s12, %s10
  $region1: #{tpu_custom_call.1} parent=0
    #allocation2 [shape = 'u8[8192]{0}', space=vmem, size = 0x2000, scoped, tag = 'input window, operand 0, single buffered']
    #allocation3 [shape = 's32[1]{0}', space=sflag, size = 0x4, scoped, tag = 'scoped memory for tpu_custom_call.1']
    #allocation4 [shape = 's32[1]{0}', space=sflag, size = 0x4, scoped, tag = 'scoped memory for tpu_custom_call.1']
    #allocation5 [shape = 'u8[16384]{0}', space=vmem, size = 0x4000, scoped, tag = 'input window, operand 1, single buffered']
    #allocation6 [shape = 's32[1]{0}', space=sflag, size = 0x4, scoped, tag = 'scoped memory for tpu_custom_call.1']
    #allocation7 [shape = 'u8[32768]{0}', space=vmem, size = 0x8000, scoped, tag = 'input window, operand 3, single buffered']
    #allocation8 [shape = 'u8[32768]{0}', space=vmem, size = 0x8000, scoped, tag = 'input window, operand 5, single buffered']
    #allocation9 [shape = 's32[1]{0}', space=sflag, size = 0x4, scoped, tag = 'scoped memory for tpu_custom_call.1']
    #allocation10 [shape = 'u8[4096]{0}', space=vmem, size = 0x1000, scoped, tag = 'output window, operand 0, single buffered']
    #allocation11 [shape = 'u8[4096]{0}', space=vmem, size = 0x1000, scoped, tag = 'output window, operand 1, single buffered']
    #allocation12 [shape = 's32[1]{0}', space=sflag, size = 0x4, scoped, tag = 'scoped memory for tpu_custom_call.1']
    %14 = vsyncpa [#allocation3], 0
    %15 = vsyncpa [#allocation6], 0
    %16 = vsyncpa [#allocation9], 0
    %17 = vsyncpa [#allocation4], 0
    %18 = vsyncpa [#allocation12], 0
    // Predicated region
    $region2: #{tpu_custom_call.1} parent=1 // pred_check
      _
    $region3: #{tpu_custom_call.1} parent=1 // pred_check_branch
      %20 = sbr.rel (0) target = $region5
    $region4: #{tpu_custom_call.1} parent=1 // pred_region
      %s22 = ssub.s32 256, 256
      %23 = vsyncadd [#allocation3], %s22
      %s24 = sshll.u32 [#allocation2], 4
      %s25 = int_to_ptr.vmem [resolvable:$true] %s24
      %30 = dma.hbm_to_vmem [thread:$0]  %s0, 256, %s25, [#allocation3], 128, 128, 8
    $region5: #{tpu_custom_call.1} parent=1 // pred_fallthru
      _
    // Predicated region
    $region6: #{tpu_custom_call.1} parent=1 // pred_check
      _
    $region7: #{tpu_custom_call.1} parent=1 // pred_check_branch
      %32 = sbr.rel (0) target = $region9
    $region8: #{tpu_custom_call.1} parent=1 // pred_region
      %s34 = ssub.s32 512, 512
      %35 = vsyncadd [#allocation6], %s34
      %s36 = sshll.u32 [#allocation5], 4
      %s37 = int_to_ptr.vmem [resolvable:$true] %s36
      %42 = dma.hbm_to_vmem [thread:$0]  %s1, 512, %s37, [#allocation6], 64, 64, 4
    $region9: #{tpu_custom_call.1} parent=1 // pred_fallthru
      _
    // Predicated region
    $region10: #{tpu_custom_call.1} parent=1 // pred_check
      _
    $region11: #{tpu_custom_call.1} parent=1 // pred_check_branch
      %44 = sbr.rel (0) target = $region13
    $region12: #{tpu_custom_call.1} parent=1 // pred_region
      _
    $region13: #{tpu_custom_call.1} parent=1 // pred_fallthru
      _
    // Predicated region
    $region14: #{tpu_custom_call.1} parent=1 // pred_check
      _
    $region15: #{tpu_custom_call.1} parent=1 // pred_check_branch
      %46 = sbr.rel (0) target = $region17
    $region16: #{tpu_custom_call.1} parent=1 // pred_region
      %s48 = ssub.s32 1024, 1024
      %49 = vsyncadd [#allocation6], %s48
      %s50 = sshll.u32 [#allocation7], 4
      %s51 = int_to_ptr.vmem [resolvable:$true] %s50
      %56 = dma.hbm_to_vmem [thread:$0]  %s3, 1024, %s51, [#allocation6], 64, 64, 4
    $region17: #{tpu_custom_call.1} parent=1 // pred_fallthru
      _
    // Predicated region
    $region18: #{tpu_custom_call.1} parent=1 // pred_check
      _
    $region19: #{tpu_custom_call.1} parent=1 // pred_check_branch
      %58 = sbr.rel (0) target = $region21
    $region20: #{tpu_custom_call.1} parent=1 // pred_region
      _
    $region21: #{tpu_custom_call.1} parent=1 // pred_fallthru
      _
    // Predicated region
    $region22: #{tpu_custom_call.1} parent=1 // pred_check
      _
    $region23: #{tpu_custom_call.1} parent=1 // pred_check_branch
      %60 = sbr.rel (0) target = $region25
    $region24: #{tpu_custom_call.1} parent=1 // pred_region
      %s62 = ssub.s32 1024, 1024
      %63 = vsyncadd [#allocation9], %s62
      %s64 = sshll.u32 [#allocation8], 4
      %s65 = int_to_ptr.vmem [resolvable:$true] %s64
      %70 = dma.hbm_to_vmem [thread:$0]  %s5, 1024, %s65, [#allocation9], 64, 64, 4
    $region25: #{tpu_custom_call.1} parent=1 // pred_fallthru
      _
    // Predicated region
    $region26: #{tpu_custom_call.1} parent=1 // pred_check
      _
    $region27: #{tpu_custom_call.1} parent=1 // pred_check_branch
      %72 = sbr.rel (0) target = $region29
    $region28: #{tpu_custom_call.1} parent=1 // pred_region
      _
    $region29: #{tpu_custom_call.1} parent=1 // pred_fallthru
      _
    // Predicated region
    $region30: #{tpu_custom_call.1} parent=1 // pred_check
      _
    $region31: #{tpu_custom_call.1} parent=1 // pred_check_branch
      %74 = sbr.rel (0) target = $region33
    $region32: #{tpu_custom_call.1} parent=1 // pred_region
      %75 = dma.done [#allocation3], 256
    $region33: #{tpu_custom_call.1} parent=1 // pred_fallthru
      _
    // Predicated region
    $region34: #{tpu_custom_call.1} parent=1 // pred_check
      _
    $region35: #{tpu_custom_call.1} parent=1 // pred_check_branch
      %77 = sbr.rel (0) target = $region37
    $region36: #{tpu_custom_call.1} parent=1 // pred_region
      %78 = dma.done [#allocation6], 512
    $region37: #{tpu_custom_call.1} parent=1 // pred_fallthru
      _
    // Predicated region
    $region38: #{tpu_custom_call.1} parent=1 // pred_check
      _
    $region39: #{tpu_custom_call.1} parent=1 // pred_check_branch
      %80 = sbr.rel (0) target = $region41
    $region40: #{tpu_custom_call.1} parent=1 // pred_region
      %81 = dma.done [#allocation6], 1024
    $region41: #{tpu_custom_call.1} parent=1 // pred_fallthru
      _
    // Predicated region
    $region42: #{tpu_custom_call.1} parent=1 // pred_check
      _
    $region43: #{tpu_custom_call.1} parent=1 // pred_check_branch
      %83 = sbr.rel (0) target = $region45
    $region44: #{tpu_custom_call.1} parent=1 // pred_region
      %84 = dma.done [#allocation9], 1024
    $region45: #{tpu_custom_call.1} parent=1 // pred_fallthru
      _
    %v86 = vld [vmem:[#allocation2] sm:$0xff]
    %v87 = vld [vmem:[#allocation2 + $0x8] sm:$0xff]
    %v88 = vpack.c.bf16 %v87, %v86
    %v89 = vld [vmem:[#allocation5] sm:$0xf]
    %v90 = vld [vmem:[#allocation5 + $0x4] sm:$0xf]
    %v91 = vld [vmem:[#allocation5 + $0x8] sm:$0xf]
    %v92 = vld [vmem:[#allocation5 + $0xc] sm:$0xf]
    %v93 = vld [vmem:[#allocation5 + $0x10] sm:$0xf]
    %v94 = vld [vmem:[#allocation5 + $0x14] sm:$0xf]
    %v95 = vld [vmem:[#allocation5 + $0x18] sm:$0xf]
    %v96 = vld [vmem:[#allocation5 + $0x1c] sm:$0xf]
    %v97 = vld [vmem:[%s2] sm:$0x1]
    %v99 = vlaneseq
    %v100 = vshrl.u32 %v99, 7
    %v101 = vsub.s32 0, %v100
    %v102 = vrot.slane %v97, %v101
    %v112 = vunpack.c.l.b16 %v89
    %v113 = vunpack.c.l.b16 %v90
    %v114 = vunpack.c.l.b16 %v91
    %v115 = vunpack.c.l.b16 %v92
    %v116 = vunpack.c.l.b16 %v93
    %v117 = vunpack.c.l.b16 %v94
    %v118 = vunpack.c.l.b16 %v95
    %v119 = vunpack.c.l.b16 %v96
    %v120 = vpack.c.b16 %v113, %v112
    %v121 = vpack.c.b16 %v115, %v114
    %v122 = vpack.c.b16 %v117, %v116
    %v123 = vpack.c.b16 %v119, %v118
    %vm128 = vcmask 523264
    %v130 = vsel %vm128, %v88, 0
    %132 = vmatprep.subr.bf16.mxu0 0
    %133 = vmatpush1.bf16.msra.mxu0 0
    %134 = vmatprep.subr.bf16.mxu0 0
    %135 = vmatpush1.bf16.msra.mxu0 0
    %136 = vmatprep.subr.bf16.mxu0 0
    %137 = vmatpush1.bf16.msra.mxu0 0
    %138 = vmatprep.subr.bf16.mxu0 0
    %139 = vmatpush1.bf16.msra.mxu0 0
    %140 = vmatprep.subr.bf16.mxu0 0
    %141 = vmatpush1.bf16.msra.mxu0 %v123
    %142 = vmatprep.subr.bf16.mxu0 0
    %143 = vmatpush1.bf16.msra.mxu0 %v122
    %144 = vmatprep.subr.bf16.mxu0 0
    %145 = vmatpush1.bf16.msra.mxu0 %v121
    %146 = vmatprep.subr.bf16.mxu0 0
    %147 = vmatpush1.bf16.msra.mxu0 %v120
    %148 = vmatprep.subr.bf16.mxu0 0
    %149 = vmatpush2.bf16.msra.mxu0 0
    %150 = vmatprep.subr.bf16.mxu0 0
    %151 = vmatpush2.bf16.msra.mxu0 0
    %152 = vmatprep.subr.bf16.mxu0 0
    %153 = vmatpush2.bf16.msra.mxu0 0
    %154 = vmatprep.subr.bf16.mxu0 0
    %155 = vmatpush2.bf16.msra.mxu0 0
    %156 = vmatprep.subr.bf16.mxu0 0
    %157 = vmatpush2.bf16.msra.mxu0 0
    %158 = vmatprep.subr.bf16.mxu0 0
    %159 = vmatpush2.bf16.msra.mxu0 0
    %160 = vmatprep.subr.bf16.mxu0 0
    %161 = vmatpush2.bf16.msra.mxu0 0
    %162 = vmatprep.subr.bf16.mxu0 0
    %163 = vmatpush2.bf16.msra.mxu0 0
    %164 = vmatprep.mubr.bf16.mxu0 0
    %165 = vmatmul.mubr.bf16.gmra.mxu0 %v130
    %v166 = vpop.f32.mrf.mxu0
    %v167 = vadd.f32 %v102, %v166
    %v168 = vpop.f32.mrf.mxu0
    %v169 = vpop.f32.mrf.mxu0
    %v170 = vadd.f32 %v102, %v169
    %v171 = vpop.f32.mrf.mxu0
    %172 = vdwg.mxu0
    %v173 = vmax.f32 %v167, 0.0
    %v174 = vmax.f32 %v170, 0.0
    %v175 = vpack.c.bf16 %v174, %v173
    %v176 = vld [vmem:[#allocation7] sm:$0xf]
    %v177 = vld [vmem:[#allocation7 + $0x4] sm:$0xf]
    %v178 = vld [vmem:[#allocation7 + $0x8] sm:$0xf]
    %v179 = vld [vmem:[#allocation7 + $0xc] sm:$0xf]
    %v180 = vld [vmem:[#allocation7 + $0x10] sm:$0xf]
    %v181 = vld [vmem:[#allocation7 + $0x14] sm:$0xf]
    %v182 = vld [vmem:[#allocation7 + $0x18] sm:$0xf]
    %v183 = vld [vmem:[#allocation7 + $0x1c] sm:$0xf]
    %v184 = vld [vmem:[#allocation7 + $0x20] sm:$0xf]
    %v185 = vld [vmem:[#allocation7 + $0x24] sm:$0xf]
    %v186 = vld [vmem:[#allocation7 + $0x28] sm:$0xf]
    %v187 = vld [vmem:[#allocation7 + $0x2c] sm:$0xf]
    %v188 = vld [vmem:[#allocation7 + $0x30] sm:$0xf]
    %v189 = vld [vmem:[#allocation7 + $0x34] sm:$0xf]
    %v190 = vld [vmem:[#allocation7 + $0x38] sm:$0xf]
    %v191 = vld [vmem:[#allocation7 + $0x3c] sm:$0xf]
    %v192 = vld [vmem:[%s4] sm:$0x1]
    %v194 = vlaneseq
    %v195 = vshrl.u32 %v194, 7
    %v196 = vsub.s32 0, %v195
    %v197 = vrot.slane %v192, %v196
    %v215 = vunpack.c.l.b16 %v176
    %v216 = vunpack.c.l.b16 %v177
    %v217 = vunpack.c.l.b16 %v178
    %v218 = vunpack.c.l.b16 %v179
    %v219 = vunpack.c.l.b16 %v180
    %v220 = vunpack.c.l.b16 %v181
    %v221 = vunpack.c.l.b16 %v182
    %v222 = vunpack.c.l.b16 %v183
    %v223 = vunpack.c.l.b16 %v184
    %v224 = vunpack.c.l.b16 %v185
    %v225 = vunpack.c.l.b16 %v186
    %v226 = vunpack.c.l.b16 %v187
    %v227 = vunpack.c.l.b16 %v188
    %v228 = vunpack.c.l.b16 %v189
    %v229 = vunpack.c.l.b16 %v190
    %v230 = vunpack.c.l.b16 %v191
    %v231 = vpack.c.b16 %v216, %v215
    %v232 = vpack.c.b16 %v218, %v217
    %v233 = vpack.c.b16 %v220, %v219
    %v234 = vpack.c.b16 %v222, %v221
    %v235 = vpack.c.b16 %v224, %v223
    %v236 = vpack.c.b16 %v226, %v225
    %v237 = vpack.c.b16 %v228, %v227
    %v238 = vpack.c.b16 %v230, %v229
    %247 = vmatprep.subr.bf16.mxu0 0
    %248 = vmatpush1.bf16.msra.mxu0 %v238
    %249 = vmatprep.subr.bf16.mxu0 0
    %250 = vmatpush1.bf16.msra.mxu0 %v237
    %251 = vmatprep.subr.bf16.mxu0 0
    %252 = vmatpush1.bf16.msra.mxu0 %v236
    %253 = vmatprep.subr.bf16.mxu0 0
    %254 = vmatpush1.bf16.msra.mxu0 %v235
    %255 = vmatprep.subr.bf16.mxu0 0
    %256 = vmatpush1.bf16.msra.mxu0 %v234
    %257 = vmatprep.subr.bf16.mxu0 0
    %258 = vmatpush1.bf16.msra.mxu0 %v233
    %259 = vmatprep.subr.bf16.mxu0 0
    %260 = vmatpush1.bf16.msra.mxu0 %v232
    %261 = vmatprep.subr.bf16.mxu0 0
    %262 = vmatpush1.bf16.msra.mxu0 %v231
    %263 = vmatprep.subr.bf16.mxu0 0
    %264 = vmatpush2.bf16.msra.mxu0 0
    %265 = vmatprep.subr.bf16.mxu0 0
    %266 = vmatpush2.bf16.msra.mxu0 0
    %267 = vmatprep.subr.bf16.mxu0 0
    %268 = vmatpush2.bf16.msra.mxu0 0
    %269 = vmatprep.subr.bf16.mxu0 0
    %270 = vmatpush2.bf16.msra.mxu0 0
    %271 = vmatprep.subr.bf16.mxu0 0
    %272 = vmatpush2.bf16.msra.mxu0 0
    %273 = vmatprep.subr.bf16.mxu0 0
    %274 = vmatpush2.bf16.msra.mxu0 0
    %275 = vmatprep.subr.bf16.mxu0 0
    %276 = vmatpush2.bf16.msra.mxu0 0
    %277 = vmatprep.subr.bf16.mxu0 0
    %278 = vmatpush2.bf16.msra.mxu0 0
    %279 = vmatprep.mubr.bf16.mxu0 0
    %280 = vmatmul.mubr.bf16.gmra.mxu0 %v175
    %v281 = vpop.f32.mrf.mxu0
    %v282 = vadd.f32 %v197, %v281
    %v283 = vpop.f32.mrf.mxu0
    %v284 = vpop.f32.mrf.mxu0
    %v285 = vadd.f32 %v197, %v284
    %v286 = vpop.f32.mrf.mxu0
    %287 = vdwg.mxu0
    %v288 = vmax.f32 %v282, 0.0
    %v289 = vmax.f32 %v285, 0.0
    %v290 = vmul.f32 %v288, %v288
    %v291 = vmul.f32 %v289, %v289
    %292 = vadd.xlane.f32.xlu0 %v290
    %v293 = vpop.xlane.xlu0 %292
    %294 = vadd.xlane.f32.xlu0 %v291
    %v295 = vpop.xlane.xlu0 %294
    %v296 = vmax.f32 %v293, 1e-24
    %v297 = vmax.f32 %v295, 1e-24
    %v298 = vrsqrt.pop %v296
    %v299 = vrsqrt.pop %v297
    %v300 = vmul.f32 %v288, %v298
    %v301 = vmul.f32 %v289, %v299
    %v302 = vpack.c.bf16 %v301, %v300
    %v303 = vld [vmem:[#allocation8] sm:$0xf]
    %v304 = vld [vmem:[#allocation8 + $0x4] sm:$0xf]
    %v305 = vld [vmem:[#allocation8 + $0x8] sm:$0xf]
    %v306 = vld [vmem:[#allocation8 + $0xc] sm:$0xf]
    %v307 = vld [vmem:[#allocation8 + $0x10] sm:$0xf]
    %v308 = vld [vmem:[#allocation8 + $0x14] sm:$0xf]
    %v309 = vld [vmem:[#allocation8 + $0x18] sm:$0xf]
    %v310 = vld [vmem:[#allocation8 + $0x1c] sm:$0xf]
    %v311 = vld [vmem:[#allocation8 + $0x20] sm:$0xf]
    %v312 = vld [vmem:[#allocation8 + $0x24] sm:$0xf]
    %v313 = vld [vmem:[#allocation8 + $0x28] sm:$0xf]
    %v314 = vld [vmem:[#allocation8 + $0x2c] sm:$0xf]
    %v315 = vld [vmem:[#allocation8 + $0x30] sm:$0xf]
    %v316 = vld [vmem:[#allocation8 + $0x34] sm:$0xf]
    %v317 = vld [vmem:[#allocation8 + $0x38] sm:$0xf]
    %v318 = vld [vmem:[#allocation8 + $0x3c] sm:$0xf]
    %v319 = vld [vmem:[%s6] sm:$0x1]
    %v321 = vlaneseq
    %v322 = vshrl.u32 %v321, 7
    %v323 = vsub.s32 0, %v322
    %v324 = vrot.slane %v319, %v323
    %v342 = vunpack.c.l.b16 %v303
    %v343 = vunpack.c.l.b16 %v304
    %v344 = vunpack.c.l.b16 %v305
    %v345 = vunpack.c.l.b16 %v306
    %v346 = vunpack.c.l.b16 %v307
    %v347 = vunpack.c.l.b16 %v308
    %v348 = vunpack.c.l.b16 %v309
    %v349 = vunpack.c.l.b16 %v310
    %v350 = vunpack.c.l.b16 %v311
    %v351 = vunpack.c.l.b16 %v312
    %v352 = vunpack.c.l.b16 %v313
    %v353 = vunpack.c.l.b16 %v314
    %v354 = vunpack.c.l.b16 %v315
    %v355 = vunpack.c.l.b16 %v316
    %v356 = vunpack.c.l.b16 %v317
    %v357 = vunpack.c.l.b16 %v318
    %v358 = vpack.c.b16 %v343, %v342
    %v359 = vpack.c.b16 %v345, %v344
    %v360 = vpack.c.b16 %v347, %v346
    %v361 = vpack.c.b16 %v349, %v348
    %v362 = vpack.c.b16 %v351, %v350
    %v363 = vpack.c.b16 %v353, %v352
    %v364 = vpack.c.b16 %v355, %v354
    %v365 = vpack.c.b16 %v357, %v356
    %374 = vmatprep.subr.bf16.mxu0 0
    %375 = vmatpush1.bf16.msra.mxu0 %v365
    %376 = vmatprep.subr.bf16.mxu0 0
    %377 = vmatpush1.bf16.msra.mxu0 %v364
    %378 = vmatprep.subr.bf16.mxu0 0
    %379 = vmatpush1.bf16.msra.mxu0 %v363
    %380 = vmatprep.subr.bf16.mxu0 0
    %381 = vmatpush1.bf16.msra.mxu0 %v362
    %382 = vmatprep.subr.bf16.mxu0 0
    %383 = vmatpush1.bf16.msra.mxu0 %v361
    %384 = vmatprep.subr.bf16.mxu0 0
    %385 = vmatpush1.bf16.msra.mxu0 %v360
    %386 = vmatprep.subr.bf16.mxu0 0
    %387 = vmatpush1.bf16.msra.mxu0 %v359
    %388 = vmatprep.subr.bf16.mxu0 0
    %389 = vmatpush1.bf16.msra.mxu0 %v358
    %390 = vmatprep.subr.bf16.mxu0 0
    %391 = vmatpush2.bf16.msra.mxu0 0
    %392 = vmatprep.subr.bf16.mxu0 0
    %393 = vmatpush2.bf16.msra.mxu0 0
    %394 = vmatprep.subr.bf16.mxu0 0
    %395 = vmatpush2.bf16.msra.mxu0 0
    %396 = vmatprep.subr.bf16.mxu0 0
    %397 = vmatpush2.bf16.msra.mxu0 0
    %398 = vmatprep.subr.bf16.mxu0 0
    %399 = vmatpush2.bf16.msra.mxu0 0
    %400 = vmatprep.subr.bf16.mxu0 0
    %401 = vmatpush2.bf16.msra.mxu0 0
    %402 = vmatprep.subr.bf16.mxu0 0
    %403 = vmatpush2.bf16.msra.mxu0 0
    %404 = vmatprep.subr.bf16.mxu0 0
    %405 = vmatpush2.bf16.msra.mxu0 0
    %406 = vmatprep.mubr.bf16.mxu0 0
    %407 = vmatmul.mubr.bf16.gmra.mxu0 %v302
    %v408 = vpop.f32.mrf.mxu0
    %v409 = vadd.f32 %v324, %v408
    %v410 = vpop.f32.mrf.mxu0
    %v411 = vpop.f32.mrf.mxu0
    %v412 = vadd.f32 %v324, %v411
    %v413 = vpop.f32.mrf.mxu0
    %414 = vdwg.mxu0
    %v416 = vunpack.c.l.b16 %v302
    %v417 = vunpack.c.h.b16 %v302
    %v418 = vpack.c.b16 %v416, %v416
    %v419 = vpack.c.b16 %v417, %v417
    %422 = vst [vmem:[#allocation10] sm:$0xf] %v418
    %423 = vst [vmem:[#allocation10 + $0x4] sm:$0xf] %v419
    %v424 = vpack.c.bf16 %v412, %v409
    %v426 = vunpack.c.l.b16 %v424
    %v427 = vunpack.c.h.b16 %v424
    %v428 = vpack.c.b16 %v426, %v426
    %v429 = vpack.c.b16 %v427, %v427
    %432 = vst [vmem:[#allocation11] sm:$0xf] %v428
    %433 = vst [vmem:[#allocation11 + $0x4] sm:$0xf] %v429
    // Predicated region
    $region46: #{tpu_custom_call.1} parent=1 // pred_check
      _
    $region47: #{tpu_custom_call.1} parent=1 // pred_check_branch
      %435 = sbr.rel (0) target = $region49
    $region48: #{tpu_custom_call.1} parent=1 // pred_region
      %s437 = ssub.s32 128, 128
      %438 = vsyncadd [#allocation4], %s437
      %s439 = sshll.u32 [#allocation10], 4
      %s440 = int_to_ptr.vmem [resolvable:$true] %s439
      %445 = dma.vmem_to_hbm [thread:$0]  %s440, 128, %s7, [#allocation4], 64, 64, 4
    $region49: #{tpu_custom_call.1} parent=1 // pred_fallthru
      _
    // Predicated region
    $region50: #{tpu_custom_call.1} parent=1 // pred_check
      _
    $region51: #{tpu_custom_call.1} parent=1 // pred_check_branch
      %447 = sbr.rel (0) target = $region53
    $region52: #{tpu_custom_call.1} parent=1 // pred_region
      %s449 = ssub.s32 128, 128
      %450 = vsyncadd [#allocation12], %s449
      %s451 = sshll.u32 [#allocation11], 4
      %s452 = int_to_ptr.vmem [resolvable:$true] %s451
      %457 = dma.vmem_to_hbm [thread:$0]  %s452, 128, %s8, [#allocation12], 64, 64, 4
    $region53: #{tpu_custom_call.1} parent=1 // pred_fallthru
      _
    // Predicated region
    $region54: #{tpu_custom_call.1} parent=1 // pred_check
      _
    $region55: #{tpu_custom_call.1} parent=1 // pred_check_branch
      %459 = sbr.rel (0) target = $region57
    $region56: #{tpu_custom_call.1} parent=1 // pred_region
      %460 = dma.done [#allocation4], 128
    $region57: #{tpu_custom_call.1} parent=1 // pred_fallthru
      _
    // Predicated region
    $region58: #{tpu_custom_call.1} parent=1 // pred_check
      _
    $region59: #{tpu_custom_call.1} parent=1 // pred_check_branch
      %462 = sbr.rel (0) target = $region61
    $region60: #{tpu_custom_call.1} parent=1 // pred_region
      %463 = dma.done [#allocation12], 128
    $region61: #{tpu_custom_call.1} parent=1 // pred_fallthru
      _
    %464 = vsyncpa [#allocation3], 1
    %465 = vsyncpa [#allocation6], 1
    %466 = vsyncpa [#allocation9], 1
    %467 = vsyncpa [#allocation4], 1
    %468 = vsyncpa [#allocation12], 1

// kernel: tpu_custom_call.1
$region0: #{tpu_custom_call.1}
  #allocation0 [shape = 'u32[]', space=smem, size = 0x4, offset = 0x4, fixed_abs, tag = 'smem constant byte address 0x4 - core index']
  #allocation1 [shape = 'u32[144,128]{1,0:T(1,128)}', space=vmem, size = 0x12000, scoped, tag = 'internal scratch']
  %s0 = inlined_call_operand.hbm [shape: f32[16,64], index: 0, kind: input, shape index: {}]
  %s1 = inlined_call_operand.hbm [shape: bf16[64,128], index: 1, kind: input, shape index: {}]
  %s2 = inlined_call_operand.vmem [shape: f32[1,128], index: 2, kind: input, shape index: {}]
  %s3 = inlined_call_operand.hbm [shape: bf16[128,128], index: 3, kind: input, shape index: {}]
  %s4 = inlined_call_operand.vmem [shape: f32[1,128], index: 4, kind: input, shape index: {}]
  %s5 = inlined_call_operand.hbm [shape: bf16[128,128], index: 5, kind: input, shape index: {}]
  %s6 = inlined_call_operand.vmem [shape: f32[1,128], index: 6, kind: input, shape index: {}]
  %s7 = inlined_call_operand.hbm [shape: bf16[16,128], index: 7, kind: output, shape index: {0}]
  %s8 = inlined_call_operand.hbm [shape: bf16[16,128], index: 8, kind: output, shape index: {1}]
  %9 = xla_tuple %s7, %s8
  %s10 = sld [smem:[#allocation0]]
  $region62: #{tpu_custom_call.1} parent=0
    _
  %s12 = ssub.s32 1, %s10
  %s13 = scalar_select 0, %s12, %s10
  $region1: #{tpu_custom_call.1} parent=0
    #allocation2 [shape = 'u8[8192]{0}', space=vmem, size = 0x2000, scoped, tag = 'input window, operand 0, single buffered']
    #allocation3 [shape = 's32[1]{0}', space=sflag, size = 0x4, scoped, tag = 'scoped memory for tpu_custom_call.1']
    #allocation4 [shape = 's32[1]{0}', space=sflag, size = 0x4, scoped, tag = 'scoped memory for tpu_custom_call.1']
    #allocation5 [shape = 'u8[16384]{0}', space=vmem, size = 0x4000, scoped, tag = 'input window, operand 1, single buffered']
    #allocation6 [shape = 's32[1]{0}', space=sflag, size = 0x4, scoped, tag = 'scoped memory for tpu_custom_call.1']
    #allocation7 [shape = 'u8[32768]{0}', space=vmem, size = 0x8000, scoped, tag = 'input window, operand 3, single buffered']
    #allocation8 [shape = 'u8[32768]{0}', space=vmem, size = 0x8000, scoped, tag = 'input window, operand 5, single buffered']
    #allocation9 [shape = 's32[1]{0}', space=sflag, size = 0x4, scoped, tag = 'scoped memory for tpu_custom_call.1']
    #allocation10 [shape = 'u8[4096]{0}', space=vmem, size = 0x1000, scoped, tag = 'output window, operand 0, single buffered']
    #allocation11 [shape = 'u8[4096]{0}', space=vmem, size = 0x1000, scoped, tag = 'output window, operand 1, single buffered']
    #allocation12 [shape = 's32[1]{0}', space=sflag, size = 0x4, scoped, tag = 'scoped memory for tpu_custom_call.1']
    %14 = vsyncpa [#allocation3], 0
    %15 = vsyncpa [#allocation6], 0
    %16 = vsyncpa [#allocation9], 0
    %17 = vsyncpa [#allocation4], 0
    %18 = vsyncpa [#allocation12], 0
    // Predicated region
    $region2: #{tpu_custom_call.1} parent=1 // pred_check
      _
    $region3: #{tpu_custom_call.1} parent=1 // pred_check_branch
      %20 = sbr.rel (0) target = $region5
    $region4: #{tpu_custom_call.1} parent=1 // pred_region
      %s22 = ssub.s32 256, 256
      %23 = vsyncadd [#allocation3], %s22
      %s24 = sshll.u32 [#allocation2], 4
      %s25 = int_to_ptr.vmem [resolvable:$true] %s24
      %30 = dma.hbm_to_vmem [thread:$0]  %s0, 256, %s25, [#allocation3], 128, 128, 8
    $region5: #{tpu_custom_call.1} parent=1 // pred_fallthru
      _
    // Predicated region
    $region6: #{tpu_custom_call.1} parent=1 // pred_check
      _
    $region7: #{tpu_custom_call.1} parent=1 // pred_check_branch
      %32 = sbr.rel (0) target = $region9
    $region8: #{tpu_custom_call.1} parent=1 // pred_region
      %s34 = ssub.s32 512, 512
      %35 = vsyncadd [#allocation6], %s34
      %s36 = sshll.u32 [#allocation5], 4
      %s37 = int_to_ptr.vmem [resolvable:$true] %s36
      %42 = dma.hbm_to_vmem [thread:$0]  %s1, 512, %s37, [#allocation6], 64, 64, 4
    $region9: #{tpu_custom_call.1} parent=1 // pred_fallthru
      _
    // Predicated region
    $region10: #{tpu_custom_call.1} parent=1 // pred_check
      _
    $region11: #{tpu_custom_call.1} parent=1 // pred_check_branch
      %44 = sbr.rel (0) target = $region13
    $region12: #{tpu_custom_call.1} parent=1 // pred_region
      _
    $region13: #{tpu_custom_call.1} parent=1 // pred_fallthru
      _
    // Predicated region
    $region14: #{tpu_custom_call.1} parent=1 // pred_check
      _
    $region15: #{tpu_custom_call.1} parent=1 // pred_check_branch
      %46 = sbr.rel (0) target = $region17
    $region16: #{tpu_custom_call.1} parent=1 // pred_region
      %s48 = ssub.s32 1024, 1024
      %49 = vsyncadd [#allocation6], %s48
      %s50 = sshll.u32 [#allocation7], 4
      %s51 = int_to_ptr.vmem [resolvable:$true] %s50
      %56 = dma.hbm_to_vmem [thread:$0]  %s3, 1024, %s51, [#allocation6], 64, 64, 4
    $region17: #{tpu_custom_call.1} parent=1 // pred_fallthru
      _
    // Predicated region
    $region18: #{tpu_custom_call.1} parent=1 // pred_check
      _
    $region19: #{tpu_custom_call.1} parent=1 // pred_check_branch
      %58 = sbr.rel (0) target = $region21
    $region20: #{tpu_custom_call.1} parent=1 // pred_region
      _
    $region21: #{tpu_custom_call.1} parent=1 // pred_fallthru
      _
    // Predicated region
    $region22: #{tpu_custom_call.1} parent=1 // pred_check
      _
    $region23: #{tpu_custom_call.1} parent=1 // pred_check_branch
      %60 = sbr.rel (0) target = $region25
    $region24: #{tpu_custom_call.1} parent=1 // pred_region
      %s62 = ssub.s32 1024, 1024
      %63 = vsyncadd [#allocation9], %s62
      %s64 = sshll.u32 [#allocation8], 4
      %s65 = int_to_ptr.vmem [resolvable:$true] %s64
      %70 = dma.hbm_to_vmem [thread:$0]  %s5, 1024, %s65, [#allocation9], 64, 64, 4
    $region25: #{tpu_custom_call.1} parent=1 // pred_fallthru
      _
    // Predicated region
    $region26: #{tpu_custom_call.1} parent=1 // pred_check
      _
    $region27: #{tpu_custom_call.1} parent=1 // pred_check_branch
      %72 = sbr.rel (0) target = $region29
    $region28: #{tpu_custom_call.1} parent=1 // pred_region
      _
    $region29: #{tpu_custom_call.1} parent=1 // pred_fallthru
      _
    // Predicated region
    $region30: #{tpu_custom_call.1} parent=1 // pred_check
      _
    $region31: #{tpu_custom_call.1} parent=1 // pred_check_branch
      %74 = sbr.rel (0) target = $region33
    $region32: #{tpu_custom_call.1} parent=1 // pred_region
      %75 = dma.done [#allocation3], 256
    $region33: #{tpu_custom_call.1} parent=1 // pred_fallthru
      _
    // Predicated region
    $region34: #{tpu_custom_call.1} parent=1 // pred_check
      _
    $region35: #{tpu_custom_call.1} parent=1 // pred_check_branch
      %77 = sbr.rel (0) target = $region37
    $region36: #{tpu_custom_call.1} parent=1 // pred_region
      %78 = dma.done [#allocation6], 512
    $region37: #{tpu_custom_call.1} parent=1 // pred_fallthru
      _
    // Predicated region
    $region38: #{tpu_custom_call.1} parent=1 // pred_check
      _
    $region39: #{tpu_custom_call.1} parent=1 // pred_check_branch
      %80 = sbr.rel (0) target = $region41
    $region40: #{tpu_custom_call.1} parent=1 // pred_region
      %81 = dma.done [#allocation6], 1024
    $region41: #{tpu_custom_call.1} parent=1 // pred_fallthru
      _
    // Predicated region
    $region42: #{tpu_custom_call.1} parent=1 // pred_check
      _
    $region43: #{tpu_custom_call.1} parent=1 // pred_check_branch
      %83 = sbr.rel (0) target = $region45
    $region44: #{tpu_custom_call.1} parent=1 // pred_region
      %84 = dma.done [#allocation9], 1024
    $region45: #{tpu_custom_call.1} parent=1 // pred_fallthru
      _
    %v86 = vld [vmem:[#allocation2] sm:$0xff]
    %v87 = vld [vmem:[#allocation2 + $0x8] sm:$0xff]
    %v88 = vpack.c.bf16 %v87, %v86
    %v89 = vld [vmem:[#allocation5] sm:$0xf]
    %v90 = vld [vmem:[#allocation5 + $0x4] sm:$0xf]
    %v91 = vld [vmem:[#allocation5 + $0x8] sm:$0xf]
    %v92 = vld [vmem:[#allocation5 + $0xc] sm:$0xf]
    %v93 = vld [vmem:[#allocation5 + $0x10] sm:$0xf]
    %v94 = vld [vmem:[#allocation5 + $0x14] sm:$0xf]
    %v95 = vld [vmem:[#allocation5 + $0x18] sm:$0xf]
    %v96 = vld [vmem:[#allocation5 + $0x1c] sm:$0xf]
    %v97 = vld [vmem:[%s2] sm:$0x1]
    %v99 = vlaneseq
    %v100 = vshrl.u32 %v99, 7
    %v101 = vsub.s32 0, %v100
    %v102 = vrot.slane %v97, %v101
    %v112 = vunpack.c.l.b16 %v89
    %v113 = vunpack.c.l.b16 %v90
    %v114 = vunpack.c.l.b16 %v91
    %v115 = vunpack.c.l.b16 %v92
    %v116 = vunpack.c.l.b16 %v93
    %v117 = vunpack.c.l.b16 %v94
    %v118 = vunpack.c.l.b16 %v95
    %v119 = vunpack.c.l.b16 %v96
    %v120 = vpack.c.b16 %v113, %v112
    %v121 = vpack.c.b16 %v115, %v114
    %v122 = vpack.c.b16 %v117, %v116
    %v123 = vpack.c.b16 %v119, %v118
    %vm128 = vcmask 523264
    %v130 = vsel %vm128, %v88, 0
    %132 = vmatprep.subr.bf16.mxu0 0
    %133 = vmatpush1.bf16.msra.mxu0 0
    %134 = vmatprep.subr.bf16.mxu0 0
    %135 = vmatpush1.bf16.msra.mxu0 0
    %136 = vmatprep.subr.bf16.mxu0 0
    %137 = vmatpush1.bf16.msra.mxu0 0
    %138 = vmatprep.subr.bf16.mxu0 0
    %139 = vmatpush1.bf16.msra.mxu0 0
    %140 = vmatprep.subr.bf16.mxu0 0
    %141 = vmatpush1.bf16.msra.mxu0 %v123
    %142 = vmatprep.subr.bf16.mxu0 0
    %143 = vmatpush1.bf16.msra.mxu0 %v122
    %144 = vmatprep.subr.bf16.mxu0 0
    %145 = vmatpush1.bf16.msra.mxu0 %v121
    %146 = vmatprep.subr.bf16.mxu0 0
    %147 = vmatpush1.bf16.msra.mxu0 %v120
    %148 = vmatprep.subr.bf16.mxu0 0
    %149 = vmatpush2.bf16.msra.mxu0 0
    %150 = vmatprep.subr.bf16.mxu0 0
    %151 = vmatpush2.bf16.msra.mxu0 0
    %152 = vmatprep.subr.bf16.mxu0 0
    %153 = vmatpush2.bf16.msra.mxu0 0
    %154 = vmatprep.subr.bf16.mxu0 0
    %155 = vmatpush2.bf16.msra.mxu0 0
    %156 = vmatprep.subr.bf16.mxu0 0
    %157 = vmatpush2.bf16.msra.mxu0 0
    %158 = vmatprep.subr.bf16.mxu0 0
    %159 = vmatpush2.bf16.msra.mxu0 0
    %160 = vmatprep.subr.bf16.mxu0 0
    %161 = vmatpush2.bf16.msra.mxu0 0
    %162 = vmatprep.subr.bf16.mxu0 0
    %163 = vmatpush2.bf16.msra.mxu0 0
    %164 = vmatprep.mubr.bf16.mxu0 0
    %165 = vmatmul.mubr.bf16.gmra.mxu0 %v130
    %v166 = vpop.f32.mrf.mxu0
    %v167 = vadd.f32 %v102, %v166
    %v168 = vpop.f32.mrf.mxu0
    %v169 = vpop.f32.mrf.mxu0
    %v170 = vadd.f32 %v102, %v169
    %v171 = vpop.f32.mrf.mxu0
    %172 = vdwg.mxu0
    %v173 = vmax.f32 %v167, 0.0
    %v174 = vmax.f32 %v170, 0.0
    %v175 = vpack.c.bf16 %v174, %v173
    %v176 = vld [vmem:[#allocation7] sm:$0xf]
    %v177 = vld [vmem:[#allocation7 + $0x4] sm:$0xf]
    %v178 = vld [vmem:[#allocation7 + $0x8] sm:$0xf]
    %v179 = vld [vmem:[#allocation7 + $0xc] sm:$0xf]
    %v180 = vld [vmem:[#allocation7 + $0x10] sm:$0xf]
    %v181 = vld [vmem:[#allocation7 + $0x14] sm:$0xf]
    %v182 = vld [vmem:[#allocation7 + $0x18] sm:$0xf]
    %v183 = vld [vmem:[#allocation7 + $0x1c] sm:$0xf]
    %v184 = vld [vmem:[#allocation7 + $0x20] sm:$0xf]
    %v185 = vld [vmem:[#allocation7 + $0x24] sm:$0xf]
    %v186 = vld [vmem:[#allocation7 + $0x28] sm:$0xf]
    %v187 = vld [vmem:[#allocation7 + $0x2c] sm:$0xf]
    %v188 = vld [vmem:[#allocation7 + $0x30] sm:$0xf]
    %v189 = vld [vmem:[#allocation7 + $0x34] sm:$0xf]
    %v190 = vld [vmem:[#allocation7 + $0x38] sm:$0xf]
    %v191 = vld [vmem:[#allocation7 + $0x3c] sm:$0xf]
    %v192 = vld [vmem:[%s4] sm:$0x1]
    %v194 = vlaneseq
    %v195 = vshrl.u32 %v194, 7
    %v196 = vsub.s32 0, %v195
    %v197 = vrot.slane %v192, %v196
    %v215 = vunpack.c.l.b16 %v176
    %v216 = vunpack.c.l.b16 %v177
    %v217 = vunpack.c.l.b16 %v178
    %v218 = vunpack.c.l.b16 %v179
    %v219 = vunpack.c.l.b16 %v180
    %v220 = vunpack.c.l.b16 %v181
    %v221 = vunpack.c.l.b16 %v182
    %v222 = vunpack.c.l.b16 %v183
    %v223 = vunpack.c.l.b16 %v184
    %v224 = vunpack.c.l.b16 %v185
    %v225 = vunpack.c.l.b16 %v186
    %v226 = vunpack.c.l.b16 %v187
    %v227 = vunpack.c.l.b16 %v188
    %v228 = vunpack.c.l.b16 %v189
    %v229 = vunpack.c.l.b16 %v190
    %v230 = vunpack.c.l.b16 %v191
    %v231 = vpack.c.b16 %v216, %v215
    %v232 = vpack.c.b16 %v218, %v217
    %v233 = vpack.c.b16 %v220, %v219
    %v234 = vpack.c.b16 %v222, %v221
    %v235 = vpack.c.b16 %v224, %v223
    %v236 = vpack.c.b16 %v226, %v225
    %v237 = vpack.c.b16 %v228, %v227
    %v238 = vpack.c.b16 %v230, %v229
    %247 = vmatprep.subr.bf16.mxu0 0
    %248 = vmatpush1.bf16.msra.mxu0 %v238
    %249 = vmatprep.subr.bf16.mxu0 0
    %250 = vmatpush1.bf16.msra.mxu0 %v237
    %251 = vmatprep.subr.bf16.mxu0 0
    %252 = vmatpush1.bf16.msra.mxu0 %v236
    %253 = vmatprep.subr.bf16.mxu0 0
    %254 = vmatpush1.bf16.msra.mxu0 %v235
    %255 = vmatprep.subr.bf16.mxu0 0
    %256 = vmatpush1.bf16.msra.mxu0 %v234
    %257 = vmatprep.subr.bf16.mxu0 0
    %258 = vmatpush1.bf16.msra.mxu0 %v233
    %259 = vmatprep.subr.bf16.mxu0 0
    %260 = vmatpush1.bf16.msra.mxu0 %v232
    %261 = vmatprep.subr.bf16.mxu0 0
    %262 = vmatpush1.bf16.msra.mxu0 %v231
    %263 = vmatprep.subr.bf16.mxu0 0
    %264 = vmatpush2.bf16.msra.mxu0 0
    %265 = vmatprep.subr.bf16.mxu0 0
    %266 = vmatpush2.bf16.msra.mxu0 0
    %267 = vmatprep.subr.bf16.mxu0 0
    %268 = vmatpush2.bf16.msra.mxu0 0
    %269 = vmatprep.subr.bf16.mxu0 0
    %270 = vmatpush2.bf16.msra.mxu0 0
    %271 = vmatprep.subr.bf16.mxu0 0
    %272 = vmatpush2.bf16.msra.mxu0 0
    %273 = vmatprep.subr.bf16.mxu0 0
    %274 = vmatpush2.bf16.msra.mxu0 0
    %275 = vmatprep.subr.bf16.mxu0 0
    %276 = vmatpush2.bf16.msra.mxu0 0
    %277 = vmatprep.subr.bf16.mxu0 0
    %278 = vmatpush2.bf16.msra.mxu0 0
    %279 = vmatprep.mubr.bf16.mxu0 0
    %280 = vmatmul.mubr.bf16.gmra.mxu0 %v175
    %v281 = vpop.f32.mrf.mxu0
    %v282 = vadd.f32 %v197, %v281
    %v283 = vpop.f32.mrf.mxu0
    %v284 = vpop.f32.mrf.mxu0
    %v285 = vadd.f32 %v197, %v284
    %v286 = vpop.f32.mrf.mxu0
    %287 = vdwg.mxu0
    %v288 = vmax.f32 %v282, 0.0
    %v289 = vmax.f32 %v285, 0.0
    %v290 = vmul.f32 %v288, %v288
    %v291 = vmul.f32 %v289, %v289
    %292 = vadd.xlane.f32.xlu0 %v290
    %v293 = vpop.xlane.xlu0 %292
    %294 = vadd.xlane.f32.xlu0 %v291
    %v295 = vpop.xlane.xlu0 %294
    %v296 = vmax.f32 %v293, 1e-24
    %v297 = vmax.f32 %v295, 1e-24
    %v298 = vrsqrt.pop %v296
    %v299 = vrsqrt.pop %v297
    %v300 = vmul.f32 %v288, %v298
    %v301 = vmul.f32 %v289, %v299
    %v302 = vpack.c.bf16 %v301, %v300
    %v303 = vld [vmem:[#allocation8] sm:$0xf]
    %v304 = vld [vmem:[#allocation8 + $0x4] sm:$0xf]
    %v305 = vld [vmem:[#allocation8 + $0x8] sm:$0xf]
    %v306 = vld [vmem:[#allocation8 + $0xc] sm:$0xf]
    %v307 = vld [vmem:[#allocation8 + $0x10] sm:$0xf]
    %v308 = vld [vmem:[#allocation8 + $0x14] sm:$0xf]
    %v309 = vld [vmem:[#allocation8 + $0x18] sm:$0xf]
    %v310 = vld [vmem:[#allocation8 + $0x1c] sm:$0xf]
    %v311 = vld [vmem:[#allocation8 + $0x20] sm:$0xf]
    %v312 = vld [vmem:[#allocation8 + $0x24] sm:$0xf]
    %v313 = vld [vmem:[#allocation8 + $0x28] sm:$0xf]
    %v314 = vld [vmem:[#allocation8 + $0x2c] sm:$0xf]
    %v315 = vld [vmem:[#allocation8 + $0x30] sm:$0xf]
    %v316 = vld [vmem:[#allocation8 + $0x34] sm:$0xf]
    %v317 = vld [vmem:[#allocation8 + $0x38] sm:$0xf]
    %v318 = vld [vmem:[#allocation8 + $0x3c] sm:$0xf]
    %v319 = vld [vmem:[%s6] sm:$0x1]
    %v321 = vlaneseq
    %v322 = vshrl.u32 %v321, 7
    %v323 = vsub.s32 0, %v322
    %v324 = vrot.slane %v319, %v323
    %v342 = vunpack.c.l.b16 %v303
    %v343 = vunpack.c.l.b16 %v304
    %v344 = vunpack.c.l.b16 %v305
    %v345 = vunpack.c.l.b16 %v306
    %v346 = vunpack.c.l.b16 %v307
    %v347 = vunpack.c.l.b16 %v308
    %v348 = vunpack.c.l.b16 %v309
    %v349 = vunpack.c.l.b16 %v310
    %v350 = vunpack.c.l.b16 %v311
    %v351 = vunpack.c.l.b16 %v312
    %v352 = vunpack.c.l.b16 %v313
    %v353 = vunpack.c.l.b16 %v314
    %v354 = vunpack.c.l.b16 %v315
    %v355 = vunpack.c.l.b16 %v316
    %v356 = vunpack.c.l.b16 %v317
    %v357 = vunpack.c.l.b16 %v318
    %v358 = vpack.c.b16 %v343, %v342
    %v359 = vpack.c.b16 %v345, %v344
    %v360 = vpack.c.b16 %v347, %v346
    %v361 = vpack.c.b16 %v349, %v348
    %v362 = vpack.c.b16 %v351, %v350
    %v363 = vpack.c.b16 %v353, %v352
    %v364 = vpack.c.b16 %v355, %v354
    %v365 = vpack.c.b16 %v357, %v356
    %374 = vmatprep.subr.bf16.mxu0 0
    %375 = vmatpush1.bf16.msra.mxu0 %v365
    %376 = vmatprep.subr.bf16.mxu0 0
    %377 = vmatpush1.bf16.msra.mxu0 %v364
    %378 = vmatprep.subr.bf16.mxu0 0
    %379 = vmatpush1.bf16.msra.mxu0 %v363
    %380 = vmatprep.subr.bf16.mxu0 0
    %381 = vmatpush1.bf16.msra.mxu0 %v362
    %382 = vmatprep.subr.bf16.mxu0 0
    %383 = vmatpush1.bf16.msra.mxu0 %v361
    %384 = vmatprep.subr.bf16.mxu0 0
    %385 = vmatpush1.bf16.msra.mxu0 %v360
    %386 = vmatprep.subr.bf16.mxu0 0
    %387 = vmatpush1.bf16.msra.mxu0 %v359
    %388 = vmatprep.subr.bf16.mxu0 0
    %389 = vmatpush1.bf16.msra.mxu0 %v358
    %390 = vmatprep.subr.bf16.mxu0 0
    %391 = vmatpush2.bf16.msra.mxu0 0
    %392 = vmatprep.subr.bf16.mxu0 0
    %393 = vmatpush2.bf16.msra.mxu0 0
    %394 = vmatprep.subr.bf16.mxu0 0
    %395 = vmatpush2.bf16.msra.mxu0 0
    %396 = vmatprep.subr.bf16.mxu0 0
    %397 = vmatpush2.bf16.msra.mxu0 0
    %398 = vmatprep.subr.bf16.mxu0 0
    %399 = vmatpush2.bf16.msra.mxu0 0
    %400 = vmatprep.subr.bf16.mxu0 0
    %401 = vmatpush2.bf16.msra.mxu0 0
    %402 = vmatprep.subr.bf16.mxu0 0
    %403 = vmatpush2.bf16.msra.mxu0 0
    %404 = vmatprep.subr.bf16.mxu0 0
    %405 = vmatpush2.bf16.msra.mxu0 0
    %406 = vmatprep.mubr.bf16.mxu0 0
    %407 = vmatmul.mubr.bf16.gmra.mxu0 %v302
    %v408 = vpop.f32.mrf.mxu0
    %v409 = vadd.f32 %v324, %v408
    %v410 = vpop.f32.mrf.mxu0
    %v411 = vpop.f32.mrf.mxu0
    %v412 = vadd.f32 %v324, %v411
    %v413 = vpop.f32.mrf.mxu0
    %414 = vdwg.mxu0
    %v416 = vunpack.c.l.b16 %v302
    %v417 = vunpack.c.h.b16 %v302
    %v418 = vpack.c.b16 %v416, %v416
    %v419 = vpack.c.b16 %v417, %v417
    %422 = vst [vmem:[#allocation10] sm:$0xf] %v418
    %423 = vst [vmem:[#allocation10 + $0x4] sm:$0xf] %v419
    %v424 = vpack.c.bf16 %v412, %v409
    %v426 = vunpack.c.l.b16 %v424
    %v427 = vunpack.c.h.b16 %v424
    %v428 = vpack.c.b16 %v426, %v426
    %v429 = vpack.c.b16 %v427, %v427
    %432 = vst [vmem:[#allocation11] sm:$0xf] %v428
    %433 = vst [vmem:[#allocation11 + $0x4] sm:$0xf] %v429
    // Predicated region
    $region46: #{tpu_custom_call.1} parent=1 // pred_check
      _
    $region47: #{tpu_custom_call.1} parent=1 // pred_check_branch
      %435 = sbr.rel (0) target = $region49
    $region48: #{tpu_custom_call.1} parent=1 // pred_region
      %s437 = ssub.s32 128, 128
      %438 = vsyncadd [#allocation4], %s437
      %s439 = sshll.u32 [#allocation10], 4
      %s440 = int_to_ptr.vmem [resolvable:$true] %s439
      %445 = dma.vmem_to_hbm [thread:$0]  %s440, 128, %s7, [#allocation4], 64, 64, 4
    $region49: #{tpu_custom_call.1} parent=1 // pred_fallthru
      _
    // Predicated region
    $region50: #{tpu_custom_call.1} parent=1 // pred_check
      _
    $region51: #{tpu_custom_call.1} parent=1 // pred_check_branch
      %447 = sbr.rel (0) target = $region53
    $region52: #{tpu_custom_call.1} parent=1 // pred_region
      %s449 = ssub.s32 128, 128
      %450 = vsyncadd [#allocation12], %s449
      %s451 = sshll.u32 [#allocation11], 4
      %s452 = int_to_ptr.vmem [resolvable:$true] %s451
      %457 = dma.vmem_to_hbm [thread:$0]  %s452, 128, %s8, [#allocation12], 64, 64, 4
    $region53: #{tpu_custom_call.1} parent=1 // pred_fallthru
      _
    // Predicated region
    $region54: #{tpu_custom_call.1} parent=1 // pred_check
      _
    $region55: #{tpu_custom_call.1} parent=1 // pred_check_branch
      %459 = sbr.rel (0) target = $region57
    $region56: #{tpu_custom_call.1} parent=1 // pred_region
      %460 = dma.done [#allocation4], 128
    $region57: #{tpu_custom_call.1} parent=1 // pred_fallthru
      _
    // Predicated region
    $region58: #{tpu_custom_call.1} parent=1 // pred_check
      _
    $region59: #{tpu_custom_call.1} parent=1 // pred_check_branch
      %462 = sbr.rel (0) target = $region61
    $region60: #{tpu_custom_call.1} parent=1 // pred_region
      %463 = dma.done [#allocation12], 128
    $region61: #{tpu_custom_call.1} parent=1 // pred_fallthru
      _
    %464 = vsyncpa [#allocation3], 1
    %465 = vsyncpa [#allocation6], 1
    %466 = vsyncpa [#allocation9], 1
    %467 = vsyncpa [#allocation4], 1
    %468 = vsyncpa [#allocation12], 1

</llo_original>
